<compile_context>
chip_gen: v5e
topology: v5e:2x2
jax: 0.10.0
libtpu: 0.0.40
codegen_flags: <defaults>
</compile_context>

<pallas_src>
import jax
import jax.numpy as jnp
import numpy as np
from jax.experimental import pallas as pl
from jax.experimental.pallas import tpu as pltpu


def _aggregate_kernel(a_ref, xu_ref, fifo_ref, ws_ref, bs_ref, out_ref, nf_ref):
    """One NC-lane tile of the aggregation.

    a_ref:    (V, K*V+1)      VMEM  graph-aggregation matrix, bias folded in
    xu_ref:   (K*V+1, TN)     VMEM  unfolded input (+ ones row), lanes = (n, c)
    fifo_ref: (L, V, TN)      VMEM  old FIFO (HBM buffer aliased with nf_ref)
    ws_ref:   (L,)            SMEM  conv3d_sum weights
    bs_ref:   (1,)            SMEM  conv3d_sum bias
    out_ref:  (V, TN)         VMEM
    nf_ref:   (L, V, TN)      VMEM  new FIFO
    """
    L = fifo_ref.shape[0]

    # Graph aggregation (conv3d_matmul) with the bias folded into the matmul:
    # one MXU matmul, lane-dense (V, TN) output, f32 accumulation.
    y = jnp.dot(a_ref[...], xu_ref[...],
                preferred_element_type=jnp.float32)            # (V, TN)

    # Read the old FIFO once; reused for both the shift and the depth sum.
    old = fifo_ref[...]                                        # (L, V, TN)

    # FIFO shift: build the shifted value fully in registers and do a single
    # full-tile store (depth is the leading axis, so this is L unmasked
    # (V, TN) tiles).  The store depends on `old`, so it can never be
    # reordered before the load even though fifo/new_fifo alias in HBM.
    shifted = jnp.concatenate(
        [y[None].astype(nf_ref.dtype), old[: L - 1].astype(nf_ref.dtype)],
        axis=0)                                                # (L, V, TN)
    nf_ref[...] = shifted

    # conv3d_sum: weighted reduction over the FIFO depth.  Weights/bias come
    # from SMEM as scalars -> vector * scalar VPU ops, no broadcast
    # materialization.  Unrolled static loop (L is small).
    acc = y * ws_ref[0]
    for l in range(1, L):
        acc = acc + old[l - 1].astype(jnp.float32) * ws_ref[l]
    out_ref[...] = (acc + bs_ref[0]).astype(out_ref.dtype)


def q_aggregate_stgcn(x, w_matmul, b_matmul, w_sum, b_sum, fifo, channels,
                      matmul_dtype=jnp.float32):
    """Forward of QAggregateStgcn (float semantics).

    x:        (N, K*C, 1, V)
    w_matmul: (V, K, 1, V, 1)   conv3d_matmul weight (out_ch=V, in_ch=K, kernel (1,V,1))
    b_matmul: (V,)
    w_sum:    (1, 1, 1, L, 1)   conv3d_sum weight (out_ch=1, in_ch=1, kernel (1,L,1))
    b_sum:    (1,)
    fifo:     (N, 1, C, L, V)
    matmul_dtype: dtype of the MXU operands (jnp.bfloat16 recommended on v6e/v7x).
    returns:  out (N, C, 1, V), new_fifo (N, 1, C, L, V)
    """
    N, KC, T, V = x.shape
    C = channels
    K = KC // C
    L = fifo.shape[3]
    assert T == 1 and fifo.shape == (N, 1, C, L, V)
    NC = N * C
    KV1 = K * V + 1

    # Lane tiling over the NC axis: pad NC up to a multiple of 128 (full-width
    # unmasked stores), tile at <=512 lanes and run the tiles as a parallel
    # grid (uses both TensorCores on v7x when NC is large).
    LANE = 128
    if NC <= 512:
        NCp = ((NC + LANE - 1) // LANE) * LANE
        TN = NCp
    else:
        TN = 512
        NCp = ((NC + TN - 1) // TN) * TN
    grid = (NCp // TN,)

    # xu_ext: (K*V+1, NCp) with xu_ext[k*V+v, n*C+c] = x[n, k*C+c, 0, v] and a
    # trailing ones row so the matmul bias is folded into the contraction.
    xu = jnp.transpose(x.reshape(N, K, C, V), (1, 3, 0, 2)).reshape(K * V, NC)
    xu_ext = jnp.concatenate([xu, jnp.ones((1, NC), xu.dtype)], axis=0)
    xu_ext = jnp.pad(xu_ext, ((0, 0), (0, NCp - NC))).astype(matmul_dtype)

    # a_ext: (V, K*V+1) with a_ext[w, k*V+v] = W[w, k, 0, v, 0] and the bias as
    # the last column.
    a_mat = w_matmul[:, :, 0, :, 0].reshape(V, K * V)
    a_ext = jnp.concatenate([a_mat, b_matmul[:, None]], axis=1).astype(matmul_dtype)

    # FIFO in lane-dense (L, V, NCp) layout (pure layout plumbing).
    fifo_t = jnp.transpose(fifo.reshape(NC, L, V), (1, 2, 0))   # (L, V, NC)
    fifo_t = jnp.pad(fifo_t, ((0, 0), (0, 0), (0, NCp - NC)))

    ws = w_sum.reshape(L).astype(jnp.float32)                   # SMEM scalars
    bs = b_sum.reshape(1).astype(jnp.float32)                   # SMEM scalar

    out_t, new_fifo_t = pl.pallas_call(
        _aggregate_kernel,
        grid_spec=pltpu.PrefetchScalarGridSpec(
            num_scalar_prefetch=0,
            grid=grid,
            in_specs=[
                pl.BlockSpec((V, KV1), lambda i: (0, 0)),        # a_ext (resident)
                pl.BlockSpec((KV1, TN), lambda i: (0, i)),       # xu_ext
                pl.BlockSpec((L, V, TN), lambda i: (0, 0, i)),   # fifo
                pl.BlockSpec(memory_space=pltpu.MemorySpace.SMEM),  # ws
                pl.BlockSpec(memory_space=pltpu.MemorySpace.SMEM),  # bs
            ],
            out_specs=[
                pl.BlockSpec((V, TN), lambda i: (0, i)),         # out
                pl.BlockSpec((L, V, TN), lambda i: (0, 0, i)),   # new fifo
            ],
        ),
        out_shape=[
            jax.ShapeDtypeStruct((V, NCp), jnp.float32),
            jax.ShapeDtypeStruct((L, V, NCp), fifo.dtype),
        ],
        compiler_params=pltpu.CompilerParams(
            dimension_semantics=("parallel",)),
        # Update the FIFO in place: input 2 (fifo) aliases output 1 (new_fifo).
        input_output_aliases={2: 1},
    )(a_ext, xu_ext, fifo_t, ws, bs)

    out = jnp.transpose(out_t[:, :NC], (1, 0)).reshape(N, C, 1, V)
    new_fifo = jnp.transpose(new_fifo_t[:, :, :NC], (2, 0, 1)).reshape(N, 1, C, L, V)
    return out, new_fifo


def _reference(x, w_m, b_m, w_s, b_s, fifo, channels):
    """Pure-JAX transliteration of the PyTorch forward (float32)."""
    N, KC, T, V = x.shape
    C = channels
    K = KC // C
    # unfold(dim=1, size=C, step=C) -> (N, K, T, V, C)
    xu = jnp.transpose(x.reshape(N, K, C, T, V), (0, 1, 3, 4, 2))
    # conv3d_matmul (kernel (1, V, 1), stride 1, no padding) -> (N, V, T, 1, C)
    y = jnp.einsum('nktvc,wkv->nwtc', xu, w_m[:, :, 0, :, 0]) \
        + b_m[None, :, None, None]
    y = y[:, :, :, None, :]
    # permute(0, 2, 4, 3, 1) -> (N, T, C, 1, V)
    y = jnp.transpose(y, (0, 2, 4, 3, 1))
    new_fifo = jnp.concatenate([y, fifo[:, :, :, :-1]], axis=3)   # (N, T, C, L, V)
    # conv3d_sum (kernel (1, L, 1))[:, 0] -> (N, C, 1, V)
    z = jnp.einsum('ntclv,l->ncv', new_fifo, w_s[0, 0, 0, :, 0]) + b_s[0]
    return z[:, :, None, :], new_fifo


if __name__ == "__main__":
    # Small, deterministic problem: N=2 batch, K=3 partitions, C=4 channels,
    # V=16 vertices, T=1 frame, L=8 FIFO depth.
    N, K, C, V, L = 2, 3, 4, 16, 8

    key = jax.random.PRNGKey(0)
    k_x, k_wm, k_bm, k_ws, k_bs, k_fifo = jax.random.split(key, 6)

    x = jax.random.normal(k_x, (N, K * C, 1, V), dtype=jnp.float32)
    w_matmul = jax.random.normal(k_wm, (V, K, 1, V, 1), dtype=jnp.float32) * 0.1
    b_matmul = jax.random.normal(k_bm, (V,), dtype=jnp.float32) * 0.1
    w_sum = jax.random.normal(k_ws, (1, 1, 1, L, 1), dtype=jnp.float32) * 0.1
    b_sum = jax.random.normal(k_bs, (1,), dtype=jnp.float32) * 0.1
    fifo = jax.random.normal(k_fifo, (N, 1, C, L, V), dtype=jnp.float32)

    ref_out, ref_fifo = _reference(x, w_matmul, b_matmul, w_sum, b_sum, fifo, C)

    # f32 MXU operands: matches the pure-JAX reference tightly.
    out, new_fifo = q_aggregate_stgcn(x, w_matmul, b_matmul, w_sum, b_sum,
                                      fifo, channels=C)
    jax.block_until_ready((out, new_fifo))
    np.testing.assert_allclose(np.asarray(out), np.asarray(ref_out),
                               rtol=1e-5, atol=1e-5)
    np.testing.assert_allclose(np.asarray(new_fifo), np.asarray(ref_fifo),
                               rtol=1e-5, atol=1e-5)

    # bf16 MXU operands (v6e/v7x fast path), f32 accumulation: loose tolerance.
    out_bf, fifo_bf = q_aggregate_stgcn(x, w_matmul, b_matmul, w_sum, b_sum,
                                        fifo, channels=C,
                                        matmul_dtype=jnp.bfloat16)
    jax.block_until_ready((out_bf, fifo_bf))
    np.testing.assert_allclose(np.asarray(out_bf), np.asarray(ref_out),
                               rtol=5e-2, atol=5e-2)
    np.testing.assert_allclose(np.asarray(fifo_bf), np.asarray(ref_fifo),
                               rtol=5e-2, atol=5e-2)

    print("KERNEL_OK")
</pallas_src>

<mosaic_0001>
module attributes {stable_mosaic.version = 11 : i64} {
  func.func @_aggregate_kernel(%arg0: i32, %arg1: memref<16x49xf32, #tpu.memory_space<vmem>>, %arg2: memref<49x128xf32, #tpu.memory_space<vmem>>, %arg3: memref<8x16x128xf32, #tpu.memory_space<vmem>>, %arg4: memref<8xf32, #tpu.memory_space<smem>>, %arg5: memref<1xf32, #tpu.memory_space<smem>>, %arg6: memref<16x128xf32, #tpu.memory_space<vmem>>, %arg7: memref<8x16x128xf32, #tpu.memory_space<vmem>>) attributes {dimension_semantics = [#tpu.dimension_semantics<parallel>], iteration_bounds = array<i64: 1>, scalar_prefetch = 0 : i64, scratch_operands = 0 : i64, tpu.core_type = #tpu.core_type<tc>, window_params = [{pipeline_mode = #tpu.pipeline_mode<synchronous>, transform_indices = @transform_0, window_bounds = array<i64: 16, 49>}, {transform_indices = @transform_1, window_bounds = array<i64: 49, 128>}, {transform_indices = @transform_2, window_bounds = array<i64: 8, 16, 128>}, {transform_indices = @transform_3, window_bounds = array<i64: 8>}, {transform_indices = @transform_4, window_bounds = array<i64: 1>}, {transform_indices = @transform_5, window_bounds = array<i64: 16, 128>}, {transform_indices = @transform_6, window_bounds = array<i64: 8, 16, 128>}]} {
    %c0 = arith.constant 0 : index
    %c0_0 = arith.constant 0 : index
    %0 = vector.load %arg1[%c0, %c0_0] : memref<16x49xf32, #tpu.memory_space<vmem>>, vector<16x49xf32>
    %c0_1 = arith.constant 0 : index
    %c0_2 = arith.constant 0 : index
    %1 = vector.load %arg2[%c0_1, %c0_2] : memref<49x128xf32, #tpu.memory_space<vmem>>, vector<49x128xf32>
    %cst = arith.constant dense<0.000000e+00> : vector<16x128xf32>
    %2 = tpu.matmul %0, %1, %cst {dimension_numbers = #tpu.dot_dimension_numbers<[1], [0], [0], [1], [0, 0, 1, 1], [], []>} : vector<16x49xf32>, vector<49x128xf32>, vector<16x128xf32> -> vector<16x128xf32>
    %c0_3 = arith.constant 0 : index
    %c0_4 = arith.constant 0 : index
    %c0_5 = arith.constant 0 : index
    %3 = vector.load %arg3[%c0_3, %c0_4, %c0_5] : memref<8x16x128xf32, #tpu.memory_space<vmem>>, vector<8x16x128xf32>
    %4 = vector.shape_cast %2 : vector<16x128xf32> to vector<1x16x128xf32>
    %5 = vector.extract_strided_slice %3 {offsets = [0, 0, 0], sizes = [7, 16, 128], strides = [1, 1, 1]} : vector<8x16x128xf32> to vector<7x16x128xf32>
    %6 = tpu.concatenate %4, %5 in 0 : vector<1x16x128xf32>, vector<7x16x128xf32> -> vector<8x16x128xf32>
    %c0_6 = arith.constant 0 : index
    %c0_7 = arith.constant 0 : index
    %c0_8 = arith.constant 0 : index
    %7 = vector.load %arg7[%c0_6, %c0_7, %c0_8] : memref<8x16x128xf32, #tpu.memory_space<vmem>>, vector<8x16x128xf32>
    tpu.vector_store %arg7[%c0_6, %c0_7, %c0_8], %6 {strides = array<i32>} : memref<8x16x128xf32, #tpu.memory_space<vmem>>, vector<8x16x128xf32>,
    %c0_9 = arith.constant 0 : index
    %8 = memref.load %arg4[%c0_9] : memref<8xf32, #tpu.memory_space<smem>>
    %9 = vector.broadcast %8 : f32 to vector<16x128xf32>
    %10 = arith.mulf %2, %9 : vector<16x128xf32>
    %11 = vector.extract_strided_slice %3 {offsets = [0, 0, 0], sizes = [1, 16, 128], strides = [1, 1, 1]} : vector<8x16x128xf32> to vector<1x16x128xf32>
    %12 = vector.shape_cast %11 : vector<1x16x128xf32> to vector<16x128xf32>
    %c1 = arith.constant 1 : index
    %13 = memref.load %arg4[%c1] : memref<8xf32, #tpu.memory_space<smem>>
    %14 = vector.broadcast %13 : f32 to vector<16x128xf32>
    %15 = arith.mulf %12, %14 : vector<16x128xf32>
    %16 = arith.addf %10, %15 : vector<16x128xf32>
    %17 = vector.extract_strided_slice %3 {offsets = [1, 0, 0], sizes = [1, 16, 128], strides = [1, 1, 1]} : vector<8x16x128xf32> to vector<1x16x128xf32>
    %18 = vector.shape_cast %17 : vector<1x16x128xf32> to vector<16x128xf32>
    %c2 = arith.constant 2 : index
    %19 = memref.load %arg4[%c2] : memref<8xf32, #tpu.memory_space<smem>>
    %20 = vector.broadcast %19 : f32 to vector<16x128xf32>
    %21 = arith.mulf %18, %20 : vector<16x128xf32>
    %22 = arith.addf %16, %21 : vector<16x128xf32>
    %23 = vector.extract_strided_slice %3 {offsets = [2, 0, 0], sizes = [1, 16, 128], strides = [1, 1, 1]} : vector<8x16x128xf32> to vector<1x16x128xf32>
    %24 = vector.shape_cast %23 : vector<1x16x128xf32> to vector<16x128xf32>
    %c3 = arith.constant 3 : index
    %25 = memref.load %arg4[%c3] : memref<8xf32, #tpu.memory_space<smem>>
    %26 = vector.broadcast %25 : f32 to vector<16x128xf32>
    %27 = arith.mulf %24, %26 : vector<16x128xf32>
    %28 = arith.addf %22, %27 : vector<16x128xf32>
    %29 = vector.extract_strided_slice %3 {offsets = [3, 0, 0], sizes = [1, 16, 128], strides = [1, 1, 1]} : vector<8x16x128xf32> to vector<1x16x128xf32>
    %30 = vector.shape_cast %29 : vector<1x16x128xf32> to vector<16x128xf32>
    %c4 = arith.constant 4 : index
    %31 = memref.load %arg4[%c4] : memref<8xf32, #tpu.memory_space<smem>>
    %32 = vector.broadcast %31 : f32 to vector<16x128xf32>
    %33 = arith.mulf %30, %32 : vector<16x128xf32>
    %34 = arith.addf %28, %33 : vector<16x128xf32>
    %35 = vector.extract_strided_slice %3 {offsets = [4, 0, 0], sizes = [1, 16, 128], strides = [1, 1, 1]} : vector<8x16x128xf32> to vector<1x16x128xf32>
    %36 = vector.shape_cast %35 : vector<1x16x128xf32> to vector<16x128xf32>
    %c5 = arith.constant 5 : index
    %37 = memref.load %arg4[%c5] : memref<8xf32, #tpu.memory_space<smem>>
    %38 = vector.broadcast %37 : f32 to vector<16x128xf32>
    %39 = arith.mulf %36, %38 : vector<16x128xf32>
    %40 = arith.addf %34, %39 : vector<16x128xf32>
    %41 = vector.extract_strided_slice %3 {offsets = [5, 0, 0], sizes = [1, 16, 128], strides = [1, 1, 1]} : vector<8x16x128xf32> to vector<1x16x128xf32>
    %42 = vector.shape_cast %41 : vector<1x16x128xf32> to vector<16x128xf32>
    %c6 = arith.constant 6 : index
    %43 = memref.load %arg4[%c6] : memref<8xf32, #tpu.memory_space<smem>>
    %44 = vector.broadcast %43 : f32 to vector<16x128xf32>
    %45 = arith.mulf %42, %44 : vector<16x128xf32>
    %46 = arith.addf %40, %45 : vector<16x128xf32>
    %47 = vector.extract_strided_slice %3 {offsets = [6, 0, 0], sizes = [1, 16, 128], strides = [1, 1, 1]} : vector<8x16x128xf32> to vector<1x16x128xf32>
    %48 = vector.shape_cast %47 : vector<1x16x128xf32> to vector<16x128xf32>
    %c7 = arith.constant 7 : index
    %49 = memref.load %arg4[%c7] : memref<8xf32, #tpu.memory_space<smem>>
    %50 = vector.broadcast %49 : f32 to vector<16x128xf32>
    %51 = arith.mulf %48, %50 : vector<16x128xf32>
    %52 = arith.addf %46, %51 : vector<16x128xf32>
    %c0_10 = arith.constant 0 : index
    %53 = memref.load %arg5[%c0_10] : memref<1xf32, #tpu.memory_space<smem>>
    %54 = vector.broadcast %53 : f32 to vector<16x128xf32>
    %55 = arith.addf %52, %54 : vector<16x128xf32>
    %c0_11 = arith.constant 0 : index
    %c0_12 = arith.constant 0 : index
    %56 = vector.load %arg6[%c0_11, %c0_12] : memref<16x128xf32, #tpu.memory_space<vmem>>, vector<16x128xf32>
    tpu.vector_store %arg6[%c0_11, %c0_12], %55 {strides = array<i32>} : memref<16x128xf32, #tpu.memory_space<vmem>>, vector<16x128xf32>,
    return
  }
  func.func @transform_0(%arg0: i32) -> (i32, i32) {
    %c0_i32 = arith.constant 0 : i32
    %c0_i32_0 = arith.constant 0 : i32
    %c0_i32_1 = arith.constant 0 : i32
    return %c0_i32, %c0_i32_0 : i32, i32
  }
  func.func @transform_1(%arg0: i32) -> (i32, i32) {
    %c0_i32 = arith.constant 0 : i32
    %c0_i32_0 = arith.constant 0 : i32
    return %c0_i32, %arg0 : i32, i32
  }
  func.func @transform_2(%arg0: i32) -> (i32, i32, i32) {
    %c0_i32 = arith.constant 0 : i32
    %c0_i32_0 = arith.constant 0 : i32
    %c0_i32_1 = arith.constant 0 : i32
    return %c0_i32, %c0_i32_0, %arg0 : i32, i32, i32
  }
  func.func @transform_3(%arg0: i32) -> i32 {
    %c0_i32 = arith.constant 0 : i32
    %c0_i32_0 = arith.constant 0 : i32
    return %c0_i32 : i32
  }
  func.func @transform_4(%arg0: i32) -> i32 {
    %c0_i32 = arith.constant 0 : i32
    %c0_i32_0 = arith.constant 0 : i32
    return %c0_i32 : i32
  }
  func.func @transform_5(%arg0: i32) -> (i32, i32) {
    %c0_i32 = arith.constant 0 : i32
    %c0_i32_0 = arith.constant 0 : i32
    return %c0_i32, %arg0 : i32, i32
  }
  func.func @transform_6(%arg0: i32) -> (i32, i32, i32) {
    %c0_i32 = arith.constant 0 : i32
    %c0_i32_0 = arith.constant 0 : i32
    %c0_i32_1 = arith.constant 0 : i32
    return %c0_i32, %c0_i32_0, %arg0 : i32, i32, i32
  }
}

</mosaic_0001>

<llo_original>
// kernel: tpu_custom_call.1
$region0: #{tpu_custom_call.1}
  #allocation0 [shape = 'u32[]', space=smem, size = 0x4, offset = 0x4, fixed_abs, tag = 'smem constant byte address 0x4 - core index']
  #allocation1 [shape = 'u32[72,128]{1,0:T(1,128)}', space=vmem, size = 0x9000, scoped, tag = 'internal scratch']
  #allocation2 [shape = 'f32[1]{0:T(128)S(6)}', space=smem, size = 0x200, scoped, tag = 'scoped memory for tpu_custom_call.1']
  %s0 = inlined_call_operand.vmem [shape: f32[16,49], index: 0, kind: input, shape index: {}]
  %s1 = inlined_call_operand.vmem [shape: f32[49,128], index: 1, kind: input, shape index: {}]
  %s2 = inlined_call_operand.hbm [shape: f32[8,16,128], index: 2, kind: input, shape index: {}, may-alias: {2,6}]
  %s3 = inlined_call_operand.vmem [shape: f32[8], index: 3, kind: input, shape index: {}]
  %s4 = inlined_call_operand.<no memory space> [shape: f32[1], index: 4, kind: input, shape index: {}]
  %s5 = inlined_call_operand.hbm [shape: f32[16,128], index: 5, kind: output, shape index: {0}]
  %s6 = inlined_call_operand.hbm [shape: f32[8,16,128], index: 6, kind: output, shape index: {1}, may-alias: {2,6}]
  %7 = xla_tuple %s5, %s6
  %s8 = sld [smem:[#allocation0]]
  $region46: #{tpu_custom_call.1} parent=0
    _
  %s10 = ssub.s32 1, %s8
  %s11 = scalar_select 0, %s10, %s8
  %12 = sst [smem:[#allocation2]] %s4
  $region1: #{tpu_custom_call.1} parent=0
    #allocation3 [shape = 'u8[65536]{0}', space=vmem, size = 0x10000, scoped, tag = 'input window, operand 2, single buffered']
    #allocation4 [shape = 's32[1]{0}', space=sflag, size = 0x4, scoped, tag = 'scoped memory for tpu_custom_call.1']
    #allocation5 [shape = 's32[1]{0}', space=sflag, size = 0x4, scoped, tag = 'scoped memory for tpu_custom_call.1']
    #allocation6 [shape = 's32[1]{0}', space=sflag, size = 0x4, scoped, tag = 'scoped memory for tpu_custom_call.1']
    #allocation7 [shape = 'u8[512]{0}', space=smem, size = 0x200, scoped, tag = 'input window, operand 3, single buffered']
    #allocation8 [shape = 'u8[8192]{0}', space=vmem, size = 0x2000, scoped, tag = 'output window, operand 0, single buffered']
    #allocation9 [shape = 'u8[65536]{0}', space=vmem, size = 0x10000, scoped, tag = 'output window, operand 1, single buffered']
    #allocation10 [shape = 's32[1]{0}', space=sflag, size = 0x4, scoped, tag = 'scoped memory for tpu_custom_call.1']
    %13 = vsyncpa [#allocation4], 0
    %14 = vsyncpa [#allocation6], 0
    %15 = vsyncpa [#allocation5], 0
    %16 = vsyncpa [#allocation10], 0
    // Predicated region
    $region2: #{tpu_custom_call.1} parent=1 // pred_check
      _
    $region3: #{tpu_custom_call.1} parent=1 // pred_check_branch
      %18 = sbr.rel (0) target = $region5
    $region4: #{tpu_custom_call.1} parent=1 // pred_region
      _
    $region5: #{tpu_custom_call.1} parent=1 // pred_fallthru
      _
    // Predicated region
    $region6: #{tpu_custom_call.1} parent=1 // pred_check
      _
    $region7: #{tpu_custom_call.1} parent=1 // pred_check_branch
      %20 = sbr.rel (0) target = $region9
    $region8: #{tpu_custom_call.1} parent=1 // pred_region
      _
    $region9: #{tpu_custom_call.1} parent=1 // pred_fallthru
      _
    // Predicated region
    $region10: #{tpu_custom_call.1} parent=1 // pred_check
      _
    $region11: #{tpu_custom_call.1} parent=1 // pred_check_branch
      %22 = sbr.rel (0) target = $region13
    $region12: #{tpu_custom_call.1} parent=1 // pred_region
      %24 = vsyncadd [#allocation4], 0
      %s25 = sshll.u32 %s2, 4
      %s26 = int_to_ptr.hbm [resolvable:$true] %s25
      %s27 = sshll.u32 [#allocation3], 4
      %s28 = int_to_ptr.vmem [resolvable:$true] %s27
      %33 = dma.hbm_to_vmem [thread:$0]  %s26, 2048, %s28, [#allocation4], 128, 128, 8
    $region13: #{tpu_custom_call.1} parent=1 // pred_fallthru
      _
    // Predicated region
    $region14: #{tpu_custom_call.1} parent=1 // pred_check
      _
    $region15: #{tpu_custom_call.1} parent=1 // pred_check_branch
      %35 = sbr.rel (0) target = $region17
    $region16: #{tpu_custom_call.1} parent=1 // pred_region
      %37 = vsyncadd [#allocation6], 0
      %s39 = sshll.u32 %s3, 4
      %s40 = int_to_ptr.vmem [resolvable:$true] %s39
      %42 = dma.vmem_to_smem %s40, 16, [#allocation7], [#allocation6]
    $region17: #{tpu_custom_call.1} parent=1 // pred_fallthru
      _
    // Predicated region
    $region18: #{tpu_custom_call.1} parent=1 // pred_check
      _
    $region19: #{tpu_custom_call.1} parent=1 // pred_check_branch
      %44 = sbr.rel (0) target = $region21
    $region20: #{tpu_custom_call.1} parent=1 // pred_region
      _
    $region21: #{tpu_custom_call.1} parent=1 // pred_fallthru
      _
    // Predicated region
    $region22: #{tpu_custom_call.1} parent=1 // pred_check
      _
    $region23: #{tpu_custom_call.1} parent=1 // pred_check_branch
      %46 = sbr.rel (0) target = $region25
    $region24: #{tpu_custom_call.1} parent=1 // pred_region
      %48 = dma.done [#allocation4], 2048
    $region25: #{tpu_custom_call.1} parent=1 // pred_fallthru
      _
    // Predicated region
    $region26: #{tpu_custom_call.1} parent=1 // pred_check
      _
    $region27: #{tpu_custom_call.1} parent=1 // pred_check_branch
      %50 = sbr.rel (0) target = $region29
    $region28: #{tpu_custom_call.1} parent=1 // pred_region
      %52 = dma.done [#allocation6], 16
    $region29: #{tpu_custom_call.1} parent=1 // pred_fallthru
      _
    %53 = sfence
    %v54 = vld [vmem:[%s0] sm:$0xff]
    %v55 = vld [vmem:[%s0 + $0x8] sm:$0xff]
    %v56 = vld [vmem:[%s1] sm:$0xff]
    %v57 = vld [vmem:[%s1 + $0x8] sm:$0xff]
    %v58 = vld [vmem:[%s1 + $0x10] sm:$0xff]
    %v59 = vld [vmem:[%s1 + $0x18] sm:$0xff]
    %v60 = vld [vmem:[%s1 + $0x20] sm:$0xff]
    %v61 = vld [vmem:[%s1 + $0x28] sm:$0xff]
    %v62 = vld [vmem:[%s1 + $0x30] sm:$0x1]
    %vm63 = vcmask 400384
    %v65 = vsel %vm63, %v54, 0
    %v68 = vsel %vm63, %v55, 0
    %vm70 = vcmask 1040384
    %v72 = vsel %vm70, %v62, 0
    %74 = vmatpush.msra.mxu0 0.0
    %75 = vmatpush.msra.mxu0 0.0
    %76 = vmatpush.msra.mxu0 0.0
    %77 = vmatpush.msra.mxu0 0.0
    %78 = vmatpush.msra.mxu0 0.0
    %79 = vmatpush.msra.mxu0 0.0
    %80 = vmatpush.msra.mxu0 0.0
    %81 = vmatpush.msra.mxu0 0.0
    %82 = vmatpush.msra.mxu0 0.0
    %83 = vmatpush.msra.mxu0 %v72
    %84 = vmatpush.msra.mxu0 %v61
    %85 = vmatpush.msra.mxu0 %v60
    %86 = vmatpush.msra.mxu0 %v59
    %87 = vmatpush.msra.mxu0 %v58
    %88 = vmatpush.msra.mxu0 %v57
    %89 = vmatpush.msra.mxu0 %v56
    %90 = vmatmul.f32.gmra.mxu0 %v65
    %v91 = vpop.f32.mrf.mxu0
    %v92 = vadd.f32 0.0, %v91
    %93 = vmatmul.f32.gmra.mxu0 %v68
    %v94 = vpop.f32.mrf.mxu0
    %v95 = vadd.f32 0.0, %v94
    %96 = vdwg.mxu0
    %v97 = vld [vmem:[#allocation3] sm:$0xff]
    %v98 = vld [vmem:[#allocation3 + $0x8] sm:$0xff]
    %v99 = vld [vmem:[#allocation3 + $0x10] sm:$0xff]
    %v100 = vld [vmem:[#allocation3 + $0x18] sm:$0xff]
    %v101 = vld [vmem:[#allocation3 + $0x20] sm:$0xff]
    %v102 = vld [vmem:[#allocation3 + $0x28] sm:$0xff]
    %v103 = vld [vmem:[#allocation3 + $0x30] sm:$0xff]
    %v104 = vld [vmem:[#allocation3 + $0x38] sm:$0xff]
    %v105 = vld [vmem:[#allocation3 + $0x40] sm:$0xff]
    %v106 = vld [vmem:[#allocation3 + $0x48] sm:$0xff]
    %v107 = vld [vmem:[#allocation3 + $0x50] sm:$0xff]
    %v108 = vld [vmem:[#allocation3 + $0x58] sm:$0xff]
    %v109 = vld [vmem:[#allocation3 + $0x60] sm:$0xff]
    %v110 = vld [vmem:[#allocation3 + $0x68] sm:$0xff]
    %111 = vst [vmem:[#allocation9] sm:$0xff] %v92
    %112 = vst [vmem:[#allocation9 + $0x8] sm:$0xff] %v95
    %113 = vst [vmem:[#allocation9 + $0x10] sm:$0xff] %v97
    %114 = vst [vmem:[#allocation9 + $0x18] sm:$0xff] %v98
    %115 = vst [vmem:[#allocation9 + $0x20] sm:$0xff] %v99
    %116 = vst [vmem:[#allocation9 + $0x28] sm:$0xff] %v100
    %117 = vst [vmem:[#allocation9 + $0x30] sm:$0xff] %v101
    %118 = vst [vmem:[#allocation9 + $0x38] sm:$0xff] %v102
    %119 = vst [vmem:[#allocation9 + $0x40] sm:$0xff] %v103
    %120 = vst [vmem:[#allocation9 + $0x48] sm:$0xff] %v104
    %121 = vst [vmem:[#allocation9 + $0x50] sm:$0xff] %v105
    %122 = vst [vmem:[#allocation9 + $0x58] sm:$0xff] %v106
    %123 = vst [vmem:[#allocation9 + $0x60] sm:$0xff] %v107
    %124 = vst [vmem:[#allocation9 + $0x68] sm:$0xff] %v108
    %125 = vst [vmem:[#allocation9 + $0x70] sm:$0xff] %v109
    %126 = vst [vmem:[#allocation9 + $0x78] sm:$0xff] %v110
    %s127 = sld [smem:[#allocation7]]
    %v128 = vstv %s127
    %v129 = vmul.f32 %v92, %v128
    %v130 = vmul.f32 %v95, %v128
    %s131 = sld [smem:[#allocation7 + $0x1]]
    %v132 = vstv %s131
    %v133 = vmul.f32 %v97, %v132
    %v134 = vmul.f32 %v98, %v132
    %v135 = vadd.f32 %v129, %v133
    %v136 = vadd.f32 %v130, %v134
    %s137 = sld [smem:[#allocation7 + $0x2]]
    %v138 = vstv %s137
    %v139 = vmul.f32 %v99, %v138
    %v140 = vmul.f32 %v100, %v138
    %v141 = vadd.f32 %v135, %v139
    %v142 = vadd.f32 %v136, %v140
    %s143 = sld [smem:[#allocation7 + $0x3]]
    %v144 = vstv %s143
    %v145 = vmul.f32 %v101, %v144
    %v146 = vmul.f32 %v102, %v144
    %v147 = vadd.f32 %v141, %v145
    %v148 = vadd.f32 %v142, %v146
    %s149 = sld [smem:[#allocation7 + $0x4]]
    %v150 = vstv %s149
    %v151 = vmul.f32 %v103, %v150
    %v152 = vmul.f32 %v104, %v150
    %v153 = vadd.f32 %v147, %v151
    %v154 = vadd.f32 %v148, %v152
    %s155 = sld [smem:[#allocation7 + $0x5]]
    %v156 = vstv %s155
    %v157 = vmul.f32 %v105, %v156
    %v158 = vmul.f32 %v106, %v156
    %v159 = vadd.f32 %v153, %v157
    %v160 = vadd.f32 %v154, %v158
    %s161 = sld [smem:[#allocation7 + $0x6]]
    %v162 = vstv %s161
    %v163 = vmul.f32 %v107, %v162
    %v164 = vmul.f32 %v108, %v162
    %v165 = vadd.f32 %v159, %v163
    %v166 = vadd.f32 %v160, %v164
    %s167 = sld [smem:[#allocation7 + $0x7]]
    %v168 = vstv %s167
    %v169 = vmul.f32 %v109, %v168
    %v170 = vmul.f32 %v110, %v168
    %v171 = vadd.f32 %v165, %v169
    %v172 = vadd.f32 %v166, %v170
    %s173 = sld [smem:[#allocation2]]
    %v174 = vstv %s173
    %v175 = vadd.f32 %v171, %v174
    %v176 = vadd.f32 %v172, %v174
    %177 = vst [vmem:[#allocation8] sm:$0xff] %v175
    %178 = vst [vmem:[#allocation8 + $0x8] sm:$0xff] %v176
    // Predicated region
    $region30: #{tpu_custom_call.1} parent=1 // pred_check
      _
    $region31: #{tpu_custom_call.1} parent=1 // pred_check_branch
      %180 = sbr.rel (0) target = $region33
    $region32: #{tpu_custom_call.1} parent=1 // pred_region
      %182 = vsyncadd [#allocation5], 0
      %s183 = sshll.u32 [#allocation8], 4
      %s184 = int_to_ptr.vmem [resolvable:$true] %s183
      %s185 = sshll.u32 %s5, 4
      %s186 = int_to_ptr.hbm [resolvable:$true] %s185
      %191 = dma.vmem_to_hbm [thread:$0]  %s184, 256, %s186, [#allocation5], 128, 128, 8
    $region33: #{tpu_custom_call.1} parent=1 // pred_fallthru
      _
    // Predicated region
    $region34: #{tpu_custom_call.1} parent=1 // pred_check
      _
    $region35: #{tpu_custom_call.1} parent=1 // pred_check_branch
      %193 = sbr.rel (0) target = $region37
    $region36: #{tpu_custom_call.1} parent=1 // pred_region
      %195 = vsyncadd [#allocation10], 0
      %s196 = sshll.u32 [#allocation9], 4
      %s197 = int_to_ptr.vmem [resolvable:$true] %s196
      %s198 = sshll.u32 %s6, 4
      %s199 = int_to_ptr.hbm [resolvable:$true] %s198
      %204 = dma.vmem_to_hbm [thread:$0]  %s197, 2048, %s199, [#allocation10], 128, 128, 8
    $region37: #{tpu_custom_call.1} parent=1 // pred_fallthru
      _
    // Predicated region
    $region38: #{tpu_custom_call.1} parent=1 // pred_check
      _
    $region39: #{tpu_custom_call.1} parent=1 // pred_check_branch
      %206 = sbr.rel (0) target = $region41
    $region40: #{tpu_custom_call.1} parent=1 // pred_region
      %208 = dma.done [#allocation5], 256
    $region41: #{tpu_custom_call.1} parent=1 // pred_fallthru
      _
    // Predicated region
    $region42: #{tpu_custom_call.1} parent=1 // pred_check
      _
    $region43: #{tpu_custom_call.1} parent=1 // pred_check_branch
      %210 = sbr.rel (0) target = $region45
    $region44: #{tpu_custom_call.1} parent=1 // pred_region
      %212 = dma.done [#allocation10], 2048
    $region45: #{tpu_custom_call.1} parent=1 // pred_fallthru
      _
    %213 = vsyncpa [#allocation4], 1
    %214 = vsyncpa [#allocation5], 1
    %215 = vsyncpa [#allocation10], 1
    %216 = vsyncpa [#allocation6], 1

</llo_original>
